<compile_context>
chip_gen: v7x
topology: tpu7x:2x2x1
jax: 0.10.0
libtpu: 0.0.40
codegen_flags: <defaults>
</compile_context>

<pallas_src>
import functools

import jax
import jax.numpy as jnp
from jax.experimental import pallas as pl
from jax.experimental.pallas import tpu as pltpu


def _round_up(x: int, m: int) -> int:
    return (x + m - 1) // m * m


def _cdiv(a: int, b: int) -> int:
    return -(-a // b)


def _vmem_cap_bytes() -> int:
    """~75% of a TensorCore's physical VMEM; conservative fallback if unknown."""
    try:
        return int(0.75 * pltpu.get_tpu_info().vmem_capacity_bytes)
    except Exception:
        return 48 * 2**20  # safe on v7x (64 MiB physical) and all older chips


def _choose_tm(m: int, row_tile: int) -> int:
    """Row tile: as big as the budget allows, but guarantee >= 2 grid steps
    when possible so ('parallel',) can shard across v7x's two TensorCores."""
    sub = 8  # f32 activation rows -> 8-row sublane multiple
    tm = min(row_tile, _round_up(m, sub))
    if tm >= m and m > sub:
        tm = _round_up(_cdiv(m, 2), sub)
    return max(sub, tm)


def _choose_th(d: int, hp: int, op: int, itm: int, budget: int) -> int:
    """Hidden tile: the largest multiple of 128 that divides Hp whose (double
    buffered) weight slices fit `budget`; Hp itself when everything fits."""
    q = hp // 128
    for nk in range(1, q + 1):
        if q % nk:
            continue
        th = hp // nk  # multiple of 128 and divides Hp exactly
        if 2 * th * (d + op) * itm <= budget or nk == q:
            return th
    return hp


def _mlp_kernel(x_ref, w1_ref, b1_ref, w2_ref, b2_ref, o_ref, acc_ref):
    """out = relu(x @ W1 + b1) @ W2 + b2, accumulated over hidden-dim blocks.

    ReLU is elementwise over the hidden dim, so splitting H and accumulating
    the second matmul into an f32 scratch is exact.
    """
    k = pl.program_id(1)

    @pl.when(k == 0)
    def _():
        acc_ref[...] = jnp.zeros_like(acc_ref)

    x = x_ref[...].astype(w1_ref.dtype)                               # in-kernel f32->bf16 cast
    h = jnp.dot(x, w1_ref[...], preferred_element_type=jnp.float32)   # MXU, f32 acc
    h = jnp.maximum(h + b1_ref[...], 0.0)                             # f32 bias + ReLU (VPU)
    acc_ref[...] += jnp.dot(h.astype(w2_ref.dtype), w2_ref[...],
                            preferred_element_type=jnp.float32)       # MXU, f32 acc

    @pl.when(k == pl.num_programs(1) - 1)
    def _():
        o_ref[...] = (acc_ref[...] + b2_ref[...]).astype(o_ref.dtype)


@functools.partial(jax.jit, static_argnames=("out_features", "row_tile"))
def fully_connected_pallas(x2d, w1, b1, w2, b2, *, out_features, row_tile=None):
    """Fused Linear->ReLU->Linear on a flat [M, D] input (pre-padded params)."""
    M, D = x2d.shape
    Hp = w1.shape[1]
    Op = w2.shape[1]
    assert w1.shape[0] == D and w2.shape[0] == Hp
    out_dtype = x2d.dtype
    itm = jnp.dtype(w1.dtype).itemsize
    itx = jnp.dtype(x2d.dtype).itemsize
    ito = jnp.dtype(out_dtype).itemsize

    cap = _vmem_cap_bytes()
    if row_tile is None:
        row_tile = 1024 if cap > 56 * 2**20 else 512  # v5e/v6e vs v7x
    tm = _choose_tm(M, row_tile)
    th = _choose_th(D, Hp, Op, itm, budget=min(cap // 2, 24 * 2**20))
    ni = _cdiv(M, tm)
    nk = Hp // th
    resident_weights = nk == 1

    # Tight per-step VMEM footprint + 25% headroom (no blanket 2x fudge).
    nbw = 1 if resident_weights else 2
    Dl = _round_up(D, 128)   # lane padding of the activation tile inside VMEM
    Dw = _round_up(D, 16)    # sublane padding of W1's leading dim
    vmem_bytes = (2 * tm * Dl * itx                 # activation tiles (2 bufs)
                  + 2 * tm * Op * ito               # output tiles (2 bufs)
                  + nbw * (Dw * th + th * Op) * itm  # weight slices
                  + nbw * 8 * th * 4 + 8 * Op * 4   # biases (sublane padded, f32)
                  + tm * Op * 4                     # f32 accumulator scratch
                  + tm * th * 4)                    # f32 hidden intermediate
    vmem_limit = int(min(max(int(1.25 * vmem_bytes), 4 * 2**20), cap))

    flops = 2 * M * (D * Hp + Hp * Op)
    bytes_accessed = (M * D * itx + (D * Hp + Hp * Op) * itm
                      + (Hp + Op) * 4 + M * Op * ito)
    cost = pl.CostEstimate(flops=flops, transcendentals=0,
                           bytes_accessed=bytes_accessed)

    # Constant-index-map operands never change across the grid -> no need for
    # double buffering; halves resident weight VMEM.
    const_mode = pl.Buffered(1) if resident_weights else None

    out = pl.pallas_call(
        _mlp_kernel,
        out_shape=jax.ShapeDtypeStruct((M, Op), out_dtype),
        grid_spec=pltpu.PrefetchScalarGridSpec(
            num_scalar_prefetch=0,
            grid=(ni, nk),
            in_specs=[
                # activations: unpadded feature dim (full-array dim), row-tiled
                pl.BlockSpec((tm, D), lambda i, k: (i, 0)),
                # W1 / b1: hidden-dim blocked; single-buffered when constant
                pl.BlockSpec((D, th), lambda i, k: (0, k), pipeline_mode=const_mode),
                pl.BlockSpec((1, th), lambda i, k: (0, k), pipeline_mode=const_mode),
                # W2: hidden-dim blocked
                pl.BlockSpec((th, Op), lambda i, k: (k, 0), pipeline_mode=const_mode),
                # b2: constant everywhere -> always single-buffered
                pl.BlockSpec((1, Op), lambda i, k: (0, 0), pipeline_mode=pl.Buffered(1)),
            ],
            out_specs=pl.BlockSpec((tm, Op), lambda i, k: (i, 0)),
            scratch_shapes=[pltpu.VMEM((tm, Op), jnp.float32)],
        ),
        compiler_params=pltpu.CompilerParams(
            dimension_semantics=("parallel", "arbitrary"),
            vmem_limit_bytes=vmem_limit,
        ),
        cost_estimate=cost,
    )(x2d, w1, b1, w2, b2)

    # No row padding was introduced; only slice off output-lane padding.
    return out if Op == out_features else out[:, :out_features]


def prepare_params(params, matmul_dtype=jnp.bfloat16):
    """Pad/cast the FullyConnectedModule parameters ONCE, outside the forward.

    Hidden/output feature dims are zero-padded to multiples of 128 (lane-dense
    MXU / store layout); weights are cast to the matmul dtype; biases stay f32
    (epilogue runs in f32) and are normalized to 2-D. Zero padding is exact for
    the kept output columns.
    """
    w1 = jnp.asarray(params["w1"])
    w2 = jnp.asarray(params["w2"])
    b1 = jnp.asarray(params["b1"]).reshape(1, -1).astype(jnp.float32)
    b2 = jnp.asarray(params["b2"]).reshape(1, -1).astype(jnp.float32)
    D, H = w1.shape
    O = w2.shape[1]
    Hp, Op = _round_up(H, 128), _round_up(O, 128)
    return {
        "w1": jnp.pad(w1.astype(matmul_dtype), ((0, 0), (0, Hp - H))),
        "b1": jnp.pad(b1, ((0, 0), (0, Hp - H))),
        "w2": jnp.pad(w2.astype(matmul_dtype), ((0, Hp - H), (0, Op - O))),
        "b2": jnp.pad(b2, ((0, 0), (0, Op - O))),
        "out_features": O,
    }


def batch_time_input_dict_wrapper(x, prepared, key="low_dim_state"):
    """Pallas equivalent of BatchTimeInputDictWrapperModule.forward.

    x: [..., D] (typically [B, T, D]). Flattens the leading dims, applies the
    wrapped FullyConnectedModule (fused MLP kernel), restores the leading shape.
    """
    init_shape = x.shape[:-1]
    x2d = x.reshape(-1, x.shape[-1])
    if x2d.shape[0] == 0:  # degenerate B*T == 0 guard
        return jnp.zeros((*init_shape, prepared["out_features"]), x.dtype)
    inputs = {key: x2d}  # the "dict wrapping" is pure glue / input selection
    out = fully_connected_pallas(
        inputs[key], prepared["w1"], prepared["b1"], prepared["w2"],
        prepared["b2"], out_features=prepared["out_features"])
    return out.reshape(*init_shape, out.shape[-1])


def init_params(rng, in_dim, hidden_dim, out_dim, dtype=jnp.float32):
    k1, k2, k3, k4 = jax.random.split(rng, 4)
    scale1 = 1.0 / jnp.sqrt(in_dim)
    scale2 = 1.0 / jnp.sqrt(hidden_dim)
    return {
        "w1": (jax.random.normal(k1, (in_dim, hidden_dim)) * scale1).astype(dtype),
        "b1": (jax.random.normal(k2, (1, hidden_dim)) * 0.01).astype(dtype),
        "w2": (jax.random.normal(k3, (hidden_dim, out_dim)) * scale2).astype(dtype),
        "b2": (jax.random.normal(k4, (1, out_dim)) * 0.01).astype(dtype),
    }


def _reference(x, params, matmul_dtype=jnp.bfloat16):
    """Same precision path (bf16 matmuls, f32 accumulation/epilogue) as kernel."""
    init_shape = x.shape[:-1]
    x2d = x.reshape(-1, x.shape[-1])
    h = jnp.dot(x2d.astype(matmul_dtype), params["w1"].astype(matmul_dtype),
                preferred_element_type=jnp.float32)
    h = h + params["b1"].reshape(1, -1).astype(jnp.float32)
    h = jnp.maximum(h, 0.0).astype(matmul_dtype)
    o = jnp.dot(h, params["w2"].astype(matmul_dtype),
                preferred_element_type=jnp.float32)
    o = o + params["b2"].reshape(1, -1).astype(jnp.float32)
    o = o.astype(x.dtype)
    return o.reshape(*init_shape, o.shape[-1])


if __name__ == "__main__":
    B, T, D = 2, 8, 32          # [B, T, D] input, B*T = 16 rows
    HIDDEN, OUT = 64, 32

    root = jax.random.PRNGKey(0)
    kx, kp = jax.random.split(root)
    x = jax.random.normal(kx, (B, T, D), dtype=jnp.float32)
    raw_params = init_params(kp, D, HIDDEN, OUT)
    prepared = prepare_params(raw_params)   # pad/cast ONCE, outside the forward

    out = batch_time_input_dict_wrapper(x, prepared, key="low_dim_state")
    out = jax.block_until_ready(out)

    assert out.shape == (B, T, OUT), out.shape
    ref = _reference(x, raw_params)
    assert jnp.allclose(out, ref, atol=2e-2, rtol=2e-2), float(
        jnp.max(jnp.abs(out - ref)))

    print("KERNEL_OK")
</pallas_src>

<mosaic_0001>
module attributes {stable_mosaic.version = 11 : i64} {
  func.func @_mlp_kernel(%arg0: i32, %arg1: i32, %arg2: memref<8x32xf32, #tpu.memory_space<vmem>>, %arg3: memref<32x128xbf16, #tpu.memory_space<vmem>>, %arg4: memref<1x128xf32, #tpu.memory_space<vmem>>, %arg5: memref<128x128xbf16, #tpu.memory_space<vmem>>, %arg6: memref<1x128xf32, #tpu.memory_space<vmem>>, %arg7: memref<8x128xf32, #tpu.memory_space<vmem>>, %arg8: memref<8x128xf32, #tpu.memory_space<vmem>>) attributes {dimension_semantics = [#tpu.dimension_semantics<parallel>, #tpu.dimension_semantics<arbitrary>], iteration_bounds = array<i64: 2, 1>, scalar_prefetch = 0 : i64, scratch_operands = 1 : i64, tpu.core_type = #tpu.core_type<tc>, window_params = [{transform_indices = @transform_0, window_bounds = array<i64: 8, 32>}, {pipeline_mode = #tpu.pipeline_mode<synchronous>, transform_indices = @transform_1, window_bounds = array<i64: 32, 128>}, {pipeline_mode = #tpu.pipeline_mode<synchronous>, transform_indices = @transform_2, window_bounds = array<i64: 1, 128>}, {pipeline_mode = #tpu.pipeline_mode<synchronous>, transform_indices = @transform_3, window_bounds = array<i64: 128, 128>}, {pipeline_mode = #tpu.pipeline_mode<synchronous>, transform_indices = @transform_4, window_bounds = array<i64: 1, 128>}, {transform_indices = @transform_5, window_bounds = array<i64: 8, 128>}]} {
    %c0_i32 = arith.constant 0 : i32
    %0 = arith.cmpi eq, %arg1, %c0_i32 : i32
    %1 = arith.extui %0 : i1 to i32
    %c0_i32_0 = arith.constant 0 : i32
    %2 = arith.cmpi ne, %1, %c0_i32_0 : i32
    scf.if %2 {
      %cst_16 = arith.constant 0.000000e+00 : f32
      %21 = vector.broadcast %cst_16 : f32 to vector<8x128xf32>
      %c0_17 = arith.constant 0 : index
      %c0_18 = arith.constant 0 : index
      %22 = vector.load %arg8[%c0_17, %c0_18] : memref<8x128xf32, #tpu.memory_space<vmem>>, vector<8x128xf32>
      tpu.vector_store %arg8[%c0_17, %c0_18], %21 {strides = array<i32>} : memref<8x128xf32, #tpu.memory_space<vmem>>, vector<8x128xf32>,
    } else {
    }
    %c0 = arith.constant 0 : index
    %c0_1 = arith.constant 0 : index
    %3 = vector.load %arg2[%c0, %c0_1] : memref<8x32xf32, #tpu.memory_space<vmem>>, vector<8x32xf32>
    %4 = arith.truncf %3 : vector<8x32xf32> to vector<8x32xbf16>
    %c0_2 = arith.constant 0 : index
    %c0_3 = arith.constant 0 : index
    %5 = vector.load %arg3[%c0_2, %c0_3] : memref<32x128xbf16, #tpu.memory_space<vmem>>, vector<32x128xbf16>
    %cst = arith.constant dense<0.000000e+00> : vector<8x128xf32>
    %6 = tpu.matmul %4, %5, %cst {dimension_numbers = #tpu.dot_dimension_numbers<[1], [0], [0], [1], [0, 0, 1, 1], [], []>} : vector<8x32xbf16>, vector<32x128xbf16>, vector<8x128xf32> -> vector<8x128xf32>
    %c0_4 = arith.constant 0 : index
    %c0_5 = arith.constant 0 : index
    %7 = vector.load %arg4[%c0_4, %c0_5] : memref<1x128xf32, #tpu.memory_space<vmem>>, vector<1x128xf32>
    %8 = vector.broadcast %7 : vector<1x128xf32> to vector<8x128xf32>
    %9 = arith.addf %6, %8 : vector<8x128xf32>
    %cst_6 = arith.constant 0.000000e+00 : f32
    %10 = vector.broadcast %cst_6 : f32 to vector<8x128xf32>
    %11 = arith.maximumf %9, %10 : vector<8x128xf32>
    %c0_7 = arith.constant 0 : index
    %c0_8 = arith.constant 0 : index
    %12 = vector.load %arg8[%c0_7, %c0_8] : memref<8x128xf32, #tpu.memory_space<vmem>>, vector<8x128xf32>
    %13 = arith.truncf %11 : vector<8x128xf32> to vector<8x128xbf16>
    %c0_9 = arith.constant 0 : index
    %c0_10 = arith.constant 0 : index
    %14 = vector.load %arg5[%c0_9, %c0_10] : memref<128x128xbf16, #tpu.memory_space<vmem>>, vector<128x128xbf16>
    %cst_11 = arith.constant dense<0.000000e+00> : vector<8x128xf32>
    %15 = tpu.matmul %13, %14, %cst_11 {dimension_numbers = #tpu.dot_dimension_numbers<[1], [0], [0], [1], [0, 0, 1, 1], [], []>} : vector<8x128xbf16>, vector<128x128xbf16>, vector<8x128xf32> -> vector<8x128xf32>
    %16 = arith.addf %12, %15 : vector<8x128xf32>
    %c0_12 = arith.constant 0 : index
    %c0_13 = arith.constant 0 : index
    %17 = vector.load %arg8[%c0_12, %c0_13] : memref<8x128xf32, #tpu.memory_space<vmem>>, vector<8x128xf32>
    tpu.vector_store %arg8[%c0_12, %c0_13], %16 {strides = array<i32>} : memref<8x128xf32, #tpu.memory_space<vmem>>, vector<8x128xf32>,
    %c0_i32_14 = arith.constant 0 : i32
    %18 = arith.cmpi eq, %arg1, %c0_i32_14 : i32
    %19 = arith.extui %18 : i1 to i32
    %c0_i32_15 = arith.constant 0 : i32
    %20 = arith.cmpi ne, %19, %c0_i32_15 : i32
    scf.if %20 {
      %c0_16 = arith.constant 0 : index
      %c0_17 = arith.constant 0 : index
      %21 = vector.load %arg8[%c0_16, %c0_17] : memref<8x128xf32, #tpu.memory_space<vmem>>, vector<8x128xf32>
      %c0_18 = arith.constant 0 : index
      %c0_19 = arith.constant 0 : index
      %22 = vector.load %arg6[%c0_18, %c0_19] : memref<1x128xf32, #tpu.memory_space<vmem>>, vector<1x128xf32>
      %23 = vector.broadcast %22 : vector<1x128xf32> to vector<8x128xf32>
      %24 = arith.addf %21, %23 : vector<8x128xf32>
      %c0_20 = arith.constant 0 : index
      %c0_21 = arith.constant 0 : index
      %25 = vector.load %arg7[%c0_20, %c0_21] : memref<8x128xf32, #tpu.memory_space<vmem>>, vector<8x128xf32>
      tpu.vector_store %arg7[%c0_20, %c0_21], %24 {strides = array<i32>} : memref<8x128xf32, #tpu.memory_space<vmem>>, vector<8x128xf32>,
    } else {
    }
    return
  }
  func.func @transform_0(%arg0: i32, %arg1: i32) -> (i32, i32) {
    %c0_i32 = arith.constant 0 : i32
    %c0_i32_0 = arith.constant 0 : i32
    return %arg0, %c0_i32 : i32, i32
  }
  func.func @transform_1(%arg0: i32, %arg1: i32) -> (i32, i32) {
    %c0_i32 = arith.constant 0 : i32
    %c0_i32_0 = arith.constant 0 : i32
    return %c0_i32, %arg1 : i32, i32
  }
  func.func @transform_2(%arg0: i32, %arg1: i32) -> (i32, i32) {
    %c0_i32 = arith.constant 0 : i32
    %c0_i32_0 = arith.constant 0 : i32
    return %c0_i32, %arg1 : i32, i32
  }
  func.func @transform_3(%arg0: i32, %arg1: i32) -> (i32, i32) {
    %c0_i32 = arith.constant 0 : i32
    %c0_i32_0 = arith.constant 0 : i32
    return %arg1, %c0_i32 : i32, i32
  }
  func.func @transform_4(%arg0: i32, %arg1: i32) -> (i32, i32) {
    %c0_i32 = arith.constant 0 : i32
    %c0_i32_0 = arith.constant 0 : i32
    %c0_i32_1 = arith.constant 0 : i32
    return %c0_i32, %c0_i32_0 : i32, i32
  }
  func.func @transform_5(%arg0: i32, %arg1: i32) -> (i32, i32) {
    %c0_i32 = arith.constant 0 : i32
    %c0_i32_0 = arith.constant 0 : i32
    return %arg0, %c0_i32 : i32, i32
  }
}

</mosaic_0001>

<llo_original>
// kernel: fully_connected_pallas.1
$region0: #{fully_connected_pallas.1}
  #allocation0 [shape = 'u32[]', space=smem, size = 0x4, offset = 0x4, fixed_abs, tag = 'smem constant byte address 0x4 - core index']
  #allocation1 [shape = 'u32[144,128]{1,0:T(1,128)}', space=vmem, size = 0x12000, scoped, tag = 'internal scratch']
  #allocation2 [shape = 'f32[8,128]{1,0:T(8,128)}', space=vmem, size = 0x1000, scoped, tag = 'scratch operand']
  %s0 = inlined_call_operand.hbm [shape: f32[16,32], index: 0, kind: input, shape index: {}]
  %s1 = inlined_call_operand.hbm [shape: bf16[32,128], index: 1, kind: input, shape index: {}]
  %s2 = inlined_call_operand.vmem [shape: f32[1,128], index: 2, kind: input, shape index: {}]
  %s3 = inlined_call_operand.hbm [shape: bf16[128,128], index: 3, kind: input, shape index: {}]
  %s4 = inlined_call_operand.vmem [shape: f32[1,128], index: 4, kind: input, shape index: {}]
  %s5 = inlined_call_operand.hbm [shape: f32[16,128], index: 5, kind: output, shape index: {}]
  %s6 = sld [smem:[#allocation0]]
  $region73: #{fully_connected_pallas.1} parent=0
    _
  %s8 = ssub.s32 1, %s6
  %s9 = scalar_select 0, %s8, %s6
  $region1: #{fully_connected_pallas.1} parent=0
    #allocation3 [shape = 'u8[8192]{0}', space=vmem, size = 0x2000, scoped, tag = 'input window, operand 0']
    #allocation4 [shape = 's32[2]{0}', space=sflag, size = 0x8, scoped, tag = 'scoped memory for fully_connected_pallas.1']
    #allocation5 [shape = 's32[2]{0}', space=sflag, size = 0x8, scoped, tag = 'scoped memory for fully_connected_pallas.1']
    #allocation6 [shape = 'u8[8192]{0}', space=vmem, size = 0x2000, scoped, tag = 'input window, operand 1, single buffered']
    #allocation7 [shape = 's32[1]{0}', space=sflag, size = 0x4, scoped, tag = 'scoped memory for fully_connected_pallas.1']
    #allocation8 [shape = 'u8[32768]{0}', space=vmem, size = 0x8000, scoped, tag = 'input window, operand 3, single buffered']
    #allocation9 [shape = 'u8[8192]{0}', space=vmem, size = 0x2000, scoped, tag = 'output window, operand 0']
    %10 = vsyncpa [#allocation4], 0
    %s11 = scalar_lea.sflag [#allocation4], 1
    %12 = vsyncpa %s11, 0
    %13 = vsyncpa [#allocation7], 0
    %14 = vsyncpa [#allocation5], 0
    %s15 = scalar_lea.sflag [#allocation5], 1
    %16 = vsyncpa %s15, 0
    loop: start=0, step=1, limit=4
    $region2: #{fully_connected_pallas.1} parent=1 // loop_pre_header
      _
    $region3: #{fully_connected_pallas.1} parent=1 // loop_header
      %s18 = sphi 0, %s22
      %p19 = scmp.ge.s32.totalorder %s18, 4
      %s25 = sphi 0, %s37
      %s26 = sphi 0, %s33
      %s27 = sphi 0, %s25
      %s28 = sphi 0, %s26
      %s29 = sphi 0, %s27
      %s30 = sphi 0, %s28
      %s40 = sphi 0, %s42
      %s43 = sphi 0, %s40
      %s44 = sphi 0, %s43
      %s60 = sphi 0, %s44
      %s66 = sphi 0, %s68
      %s69 = sphi 0, %s66
      %s70 = sphi 0, %s69
      %s86 = sphi 0, %s70
      %s92 = sphi 0, %s94
      %s95 = sphi 0, %s92
      %s96 = sphi 0, %s95
      %s112 = sphi 0, %s96
      %s118 = sphi 0, %s120
      %s121 = sphi 0, %s118
      %s122 = sphi 0, %s121
      %s138 = sphi 0, %s122
      %s142 = sphi 0, %s142
      %s144 = sphi 0, %s142
      %s145 = sphi 0, %s144
      %s159 = sphi 0, %s145
      %s165 = sphi 0, %s167
      %s168 = sphi 0, %s165
      %s169 = sphi 0, %s168
      %s185 = sphi 0, %s169
    $region4: #{fully_connected_pallas.1} parent=1 // loop_header_branch
      %21 = sbr.rel (%p19) target = $region8
    $region5: #{fully_connected_pallas.1} parent=1 // loop_body
      %s23 = ssub.s32 %s18, 1
      %s24 = ssub.s32 %s18, 2
      %s31 = sadd.s32 1, %s26
      %p32 = scmp.ge.s32.totalorder %s31, 1
      %s33 = scalar_select %p32, 0, %s31
      %s34 = sadd.s32 1, %s25
      %s35 = scalar_select %p32, %s34, %s25
      %p36 = scmp.ge.s32.totalorder %s35, 2
      %s37 = scalar_select %p36, 0, %s35
      %s38 = ssub.s32 %s25, %s37
      %p39 = scmp.eq.s32.totalorder %s38, 0
      %s41 = sadd.s32 %s40, 1
      %s42 = scalar_select %p39, %s40, %s41
      %p45 = pneg %p39
      %p46 = scmp.eq.s32.totalorder %s18, 1
      %p47 = por %p45, %p46
      %p48 = scmp.ne.s32.totalorder %s40, %s43
      %p49 = scmp.eq.s32.totalorder %s18, 0
      %p50 = por %p48, %p49
      %p51 = scmp.ne.s32.totalorder %s40, %s43
      %p52 = scmp.eq.s32.totalorder %s23, 1
      %p53 = por %p51, %p52
      %p54 = scmp.ne.s32.totalorder %s43, %s44
      %p55 = scmp.eq.s32.totalorder %s23, 0
      %p56 = por %p54, %p55
      %p57 = scmp.ne.s32.totalorder %s43, %s44
      %p58 = scmp.eq.s32.totalorder %s24, 1
      %p59 = por %p57, %p58
      %p61 = scmp.ne.s32.totalorder %s44, %s60
      %p62 = scmp.eq.s32.totalorder %s24, 0
      %p63 = por %p61, %p62
      %s64 = ssub.s32 %s26, %s33
      %p65 = scmp.eq.s32.totalorder %s64, 0
      %s67 = sadd.s32 %s66, 1
      %s68 = scalar_select %p65, %s66, %s67
      %p71 = pneg %p65
      %p72 = scmp.eq.s32.totalorder %s18, 1
      %p73 = por %p71, %p72
      %p74 = scmp.ne.s32.totalorder %s66, %s69
      %p75 = scmp.eq.s32.totalorder %s18, 0
      %p76 = por %p74, %p75
      %p77 = scmp.ne.s32.totalorder %s66, %s69
      %p78 = scmp.eq.s32.totalorder %s23, 1
      %p79 = por %p77, %p78
      %p80 = scmp.ne.s32.totalorder %s69, %s70
      %p81 = scmp.eq.s32.totalorder %s23, 0
      %p82 = por %p80, %p81
      %p83 = scmp.ne.s32.totalorder %s69, %s70
      %p84 = scmp.eq.s32.totalorder %s24, 1
      %p85 = por %p83, %p84
      %p87 = scmp.ne.s32.totalorder %s70, %s86
      %p88 = scmp.eq.s32.totalorder %s24, 0
      %p89 = por %p87, %p88
      %s90 = ssub.s32 %s26, %s33
      %p91 = scmp.eq.s32.totalorder %s90, 0
      %s93 = sadd.s32 %s92, 1
      %s94 = scalar_select %p91, %s92, %s93
      %p97 = pneg %p91
      %p98 = scmp.eq.s32.totalorder %s18, 1
      %p99 = por %p97, %p98
      %p100 = scmp.ne.s32.totalorder %s92, %s95
      %p101 = scmp.eq.s32.totalorder %s18, 0
      %p102 = por %p100, %p101
      %p103 = scmp.ne.s32.totalorder %s92, %s95
      %p104 = scmp.eq.s32.totalorder %s23, 1
      %p105 = por %p103, %p104
      %p106 = scmp.ne.s32.totalorder %s95, %s96
      %p107 = scmp.eq.s32.totalorder %s23, 0
      %p108 = por %p106, %p107
      %p109 = scmp.ne.s32.totalorder %s95, %s96
      %p110 = scmp.eq.s32.totalorder %s24, 1
      %p111 = por %p109, %p110
      %p113 = scmp.ne.s32.totalorder %s96, %s112
      %p114 = scmp.eq.s32.totalorder %s24, 0
      %p115 = por %p113, %p114
      %s116 = ssub.s32 %s26, %s33
      %p117 = scmp.eq.s32.totalorder %s116, 0
      %s119 = sadd.s32 %s118, 1
      %s120 = scalar_select %p117, %s118, %s119
      %p123 = pneg %p117
      %p124 = scmp.eq.s32.totalorder %s18, 1
      %p125 = por %p123, %p124
      %p126 = scmp.ne.s32.totalorder %s118, %s121
      %p127 = scmp.eq.s32.totalorder %s18, 0
      %p128 = por %p126, %p127
      %p129 = scmp.ne.s32.totalorder %s118, %s121
      %p130 = scmp.eq.s32.totalorder %s23, 1
      %p131 = por %p129, %p130
      %p132 = scmp.ne.s32.totalorder %s121, %s122
      %p133 = scmp.eq.s32.totalorder %s23, 0
      %p134 = por %p132, %p133
      %p135 = scmp.ne.s32.totalorder %s121, %s122
      %p136 = scmp.eq.s32.totalorder %s24, 1
      %p137 = por %p135, %p136
      %p139 = scmp.ne.s32.totalorder %s122, %s138
      %p140 = scmp.eq.s32.totalorder %s24, 0
      %p141 = por %p139, %p140
      %s143 = sadd.s32 %s142, 1
      %p146 = scmp.eq.s32.totalorder %s18, 1
      %p147 = scmp.ne.s32.totalorder %s142, %s144
      %p148 = scmp.eq.s32.totalorder %s18, 0
      %p149 = por %p147, %p148
      %p150 = scmp.ne.s32.totalorder %s142, %s144
      %p151 = scmp.eq.s32.totalorder %s23, 1
      %p152 = por %p150, %p151
      %p153 = scmp.ne.s32.totalorder %s144, %s145
      %p154 = scmp.eq.s32.totalorder %s23, 0
      %p155 = por %p153, %p154
      %p156 = scmp.ne.s32.totalorder %s144, %s145
      %p157 = scmp.eq.s32.totalorder %s24, 1
      %p158 = por %p156, %p157
      %p160 = scmp.ne.s32.totalorder %s145, %s159
      %p161 = scmp.eq.s32.totalorder %s24, 0
      %p162 = por %p160, %p161
      %s163 = ssub.s32 %s25, %s37
      %p164 = scmp.eq.s32.totalorder %s163, 0
      %s166 = sadd.s32 %s165, 1
      %s167 = scalar_select %p164, %s165, %s166
      %p170 = pneg %p164
      %p171 = scmp.eq.s32.totalorder %s18, 1
      %p172 = por %p170, %p171
      %p173 = scmp.ne.s32.totalorder %s165, %s168
      %p174 = scmp.eq.s32.totalorder %s18, 0
      %p175 = por %p173, %p174
      %p176 = scmp.ne.s32.totalorder %s165, %s168
      %p177 = scmp.eq.s32.totalorder %s23, 1
      %p178 = por %p176, %p177
      %p179 = scmp.ne.s32.totalorder %s168, %s169
      %p180 = scmp.eq.s32.totalorder %s23, 0
      %p181 = por %p179, %p180
      %p182 = scmp.ne.s32.totalorder %s168, %s169
      %p183 = scmp.eq.s32.totalorder %s24, 1
      %p184 = por %p182, %p183
      %p186 = scmp.ne.s32.totalorder %s169, %s185
      %p187 = scmp.eq.s32.totalorder %s24, 0
      %p188 = por %p186, %p187
      %p189 = scmp.le.s32.totalorder 1, %s18
      %p190 = scmp.lt.s32.totalorder %s18, 3
      %p191 = pnand %p189, %p190
      %p192 = pneg %p191
      // Predicated region
      $region9: #{fully_connected_pallas.1} parent=5 // pred_check
        _
      $region10: #{fully_connected_pallas.1} parent=5 // pred_check_branch
        %194 = sbr.rel (%p191) target = $region12
      $region11: #{fully_connected_pallas.1} parent=5 // pred_region
        %s195 = ssub.s32 %s18, 1
        // Predicated region
        $region13: #{fully_connected_pallas.1} parent=11 // pred_check
          %p196 = pneg %p82
        $region14: #{fully_connected_pallas.1} parent=11 // pred_check_branch
          %198 = sbr.rel (%p196) target = $region16
        $region15: #{fully_connected_pallas.1} parent=11 // pred_region
          %s200 = ssub.s32 256, 256
          %201 = vsyncadd [#allocation7], %s200
          %s202 = smul.addr %s28, 64
          %s203 = scalar_lea.hbm %s1, %s202
          %s204 = sshll.u32 [#allocation6], 4
          %s205 = int_to_ptr.vmem [resolvable:$true] %s204
          %210 = dma.hbm_to_vmem [thread:$0]  %s203, 256, %s205, [#allocation7], 64, 64, 4
        $region16: #{fully_connected_pallas.1} parent=11 // pred_fallthru
          _
        // Predicated region
        $region17: #{fully_connected_pallas.1} parent=11 // pred_check
          %p211 = pneg %p108
        $region18: #{fully_connected_pallas.1} parent=11 // pred_check_branch
          %213 = sbr.rel (%p211) target = $region20
        $region19: #{fully_connected_pallas.1} parent=11 // pred_region
          %p214 = scmp.lt.s32.totalorder %s28, 0
          %s215 = scalar_select %p214, %s28, 0
          %s216 = scalar_lea.vmem %s2, %s215
        $region20: #{fully_connected_pallas.1} parent=11 // pred_fallthru
          _
        // Predicated region
        $region21: #{fully_connected_pallas.1} parent=11 // pred_check
          %p217 = pneg %p134
        $region22: #{fully_connected_pallas.1} parent=11 // pred_check_branch
          %219 = sbr.rel (%p217) target = $region24
        $region23: #{fully_connected_pallas.1} parent=11 // pred_region
          %s220 = smul.u32 16, %s28
          %s222 = ssub.s32 1024, 1024
          %223 = vsyncadd [#allocation7], %s222
          %s224 = smul.addr %s220, 64
          %s225 = scalar_lea.hbm %s3, %s224
          %s226 = sshll.u32 [#allocation8], 4
          %s227 = int_to_ptr.vmem [resolvable:$true] %s226
          %232 = dma.hbm_to_vmem [thread:$0]  %s225, 1024, %s227, [#allocation7], 64, 64, 4
        $region24: #{fully_connected_pallas.1} parent=11 // pred_fallthru
          _
        // Predicated region
        $region25: #{fully_connected_pallas.1} parent=11 // pred_check
          %p233 = pneg %p155
        $region26: #{fully_connected_pallas.1} parent=11 // pred_check_branch
          %235 = sbr.rel (%p233) target = $region28
        $region27: #{fully_connected_pallas.1} parent=11 // pred_region
          _
        $region28: #{fully_connected_pallas.1} parent=11 // pred_fallthru
          _
      $region12: #{fully_connected_pallas.1} parent=5 // pred_fallthru
        _
      %p236 = scmp.lt.s32.totalorder %s18, 2
      // Predicated region
      $region29: #{fully_connected_pallas.1} parent=5 // pred_check
        %p237 = pneg %p236
      $region30: #{fully_connected_pallas.1} parent=5 // pred_check_branch
        %239 = sbr.rel (%p237) target = $region32
      $region31: #{fully_connected_pallas.1} parent=5 // pred_region
        // Predicated region
        $region33: #{fully_connected_pallas.1} parent=31 // pred_check
          %p240 = pneg %p50
        $region34: #{fully_connected_pallas.1} parent=31 // pred_check_branch
          %242 = sbr.rel (%p240) target = $region36
        $region35: #{fully_connected_pallas.1} parent=31 // pred_region
          %s243 = sand.u32 %s40, 1
          %s244 = scalar_lea.sflag [#allocation4], %s243
          %s245 = sand.u32 %s40, 1
          %s246 = smul.addr %s245, 8
          %s247 = scalar_lea.vmem [#allocation3], %s246
          %s249 = ssub.s32 128, 128
          %250 = vsyncadd %s244, %s249
          %s251 = smul.addr %s25, 128
          %s252 = scalar_lea.hbm %s0, %s251
          %s254 = sshll.u32 %s247, 4
          %s255 = int_to_ptr.vmem [resolvable:$true] %s254
          %257 = dma.hbm_to_vmem [thread:$0]  %s252, 128, %s255, %s244
        $region36: #{fully_connected_pallas.1} parent=31 // pred_fallthru
          _
      $region32: #{fully_connected_pallas.1} parent=5 // pred_fallthru
        _
      %p258 = scmp.le.s32.totalorder 1, %s18
      %p259 = scmp.lt.s32.totalorder %s18, 3
      %p260 = pnand %p258, %p259
      %p261 = pneg %p260
      // Predicated region
      $region37: #{fully_connected_pallas.1} parent=5 // pred_check
        _
      $region38: #{fully_connected_pallas.1} parent=5 // pred_check_branch
        %263 = sbr.rel (%p260) target = $region40
      $region39: #{fully_connected_pallas.1} parent=5 // pred_region
        %s264 = ssub.s32 %s18, 1
        %s265 = sand.u32 %s43, 1
        %s266 = scalar_lea.sflag [#allocation4], %s265
        %s267 = sand.u32 %s43, 1
        %s268 = smul.addr %s267, 8
        %s269 = scalar_lea.vmem [#allocation3], %s268
        // Predicated region
        $region41: #{fully_connected_pallas.1} parent=39 // pred_check
          %p270 = pneg %p56
        $region42: #{fully_connected_pallas.1} parent=39 // pred_check_branch
          %272 = sbr.rel (%p270) target = $region44
        $region43: #{fully_connected_pallas.1} parent=39 // pred_region
          %273 = dma.done %s266, 128
        $region44: #{fully_connected_pallas.1} parent=39 // pred_fallthru
          _
        // Predicated region
        $region45: #{fully_connected_pallas.1} parent=39 // pred_check
          %p274 = pneg %p82
        $region46: #{fully_connected_pallas.1} parent=39 // pred_check_branch
          %276 = sbr.rel (%p274) target = $region48
        $region47: #{fully_connected_pallas.1} parent=39 // pred_region
          %277 = dma.done [#allocation7], 256
        $region48: #{fully_connected_pallas.1} parent=39 // pred_fallthru
          _
        // Predicated region
        $region49: #{fully_connected_pallas.1} parent=39 // pred_check
          %p278 = pneg %p134
        $region50: #{fully_connected_pallas.1} parent=39 // pred_check_branch
          %280 = sbr.rel (%p278) target = $region52
        $region51: #{fully_connected_pallas.1} parent=39 // pred_region
          %281 = dma.done [#allocation7], 1024
        $region52: #{fully_connected_pallas.1} parent=39 // pred_fallthru
          _
        %s282 = sand.u32 %s43, 1
        %s283 = scalar_lea.sflag [#allocation4], %s282
        %s284 = sand.u32 %s43, 1
        %s285 = smul.addr %s284, 8
        %s286 = scalar_lea.vmem [#allocation3], %s285
        %p287 = pneg %p56
        %p288 = pneg %p53
        %p289 = pneg %p82
        %p290 = pneg %p79
        %p291 = scmp.lt.s32.totalorder %s28, 0
        %s292 = scalar_select %p291, %s28, 0
        %s293 = scalar_lea.vmem %s2, %s292
        %p294 = pneg %p108
        %p295 = pneg %p105
        %p296 = pneg %p134
        %p297 = pneg %p131
        %p298 = pneg %p155
        %p299 = pneg %p152
        %p300 = pneg %p181
        %p301 = pneg %p178
        %s302 = sand.u32 %s168, 1
        %s303 = scalar_lea.sflag [#allocation5], %s302
        %s304 = sand.u32 %s168, 1
        %s305 = smul.addr %s304, 8
        %s306 = scalar_lea.vmem [#allocation9], %s305
        %p307 = scmp.lt.s32.totalorder %s28, 0
        %s308 = scalar_select %p307, %s28, 0
        %s309 = scalar_lea.vmem %s2, %s308
        %s310 = smul.u32 16, %s28
        %p312 = scmp.eq.s32.totalorder %s28, 0
        // Predicated region
        $region53: #{fully_connected_pallas.1} parent=39 // pred_check
          %p313 = pneg %p312
        $region54: #{fully_connected_pallas.1} parent=39 // pred_check_branch
          %315 = sbr.rel (%p313) target = $region56
        $region55: #{fully_connected_pallas.1} parent=39 // pred_region
          %316 = vst [vmem:[#allocation2] sm:$0xff] 0.0
        $region56: #{fully_connected_pallas.1} parent=39 // pred_fallthru
          _
        %v317 = vld [vmem:[%s269] sm:$0xff]
        %v318 = vpack.c.bf16 %v317, %v317
        %v319 = vld [vmem:[#allocation6] sm:$0xf]
        %v320 = vld [vmem:[#allocation6 + $0x4] sm:$0xf]
        %v321 = vld [vmem:[#allocation6 + $0x8] sm:$0xf]
        %v322 = vld [vmem:[#allocation6 + $0xc] sm:$0xf]
        %v323 = vld [vmem:[%s309] sm:$0x1]
        %v325 = vlaneseq
        %v326 = vshrl.u32 %v325, 7
        %v327 = vsub.s32 0, %v326
        %v328 = vrot.slane %v323, %v327
        %v334 = vunpack.c.l.b16 %v319
        %v335 = vunpack.c.l.b16 %v320
        %v336 = vunpack.c.l.b16 %v321
        %v337 = vunpack.c.l.b16 %v322
        %v338 = vpack.c.b16 %v335, %v334
        %v339 = vpack.c.b16 %v337, %v336
        %vm342 = vcmask 261120
        %v344 = vsel %vm342, %v318, 0
        %346 = vmatprep.subr.bf16.mxu0 0
        %347 = vmatpush1.bf16.msra.mxu0 %v338
        %348 = vmatprep.subr.bf16.mxu0 0
        %349 = vmatpush1.bf16.msra.mxu0 %v339
        %350 = vmatprep.subr.bf16.mxu0 0
        %351 = vmatpush1.bf16.msra.mxu0 0
        %352 = vmatprep.subr.bf16.mxu0 0
        %353 = vmatpush1.bf16.msra.mxu0 0
        %354 = vmatprep.subr.bf16.mxu0 0
        %355 = vmatpush1.bf16.msra.mxu0 0
        %356 = vmatprep.subr.bf16.mxu0 0
        %357 = vmatpush1.bf16.msra.mxu0 0
        %358 = vmatprep.subr.bf16.mxu0 0
        %359 = vmatpush1.bf16.msra.mxu0 0
        %360 = vmatprep.subr.bf16.mxu0 0
        %361 = vmatpush1.bf16.msra.mxu0 0
        %362 = vmatprep.subr.bf16.mxu0 0
        %363 = vmatpush1.bf16.msra.mxu0 0
        %364 = vmatprep.subr.bf16.mxu0 0
        %365 = vmatpush1.bf16.msra.mxu0 0
        %366 = vmatprep.subr.bf16.mxu0 0
        %367 = vmatpush1.bf16.msra.mxu0 0
        %368 = vmatprep.subr.bf16.mxu0 0
        %369 = vmatpush1.bf16.msra.mxu0 0
        %370 = vmatprep.subr.bf16.mxu0 0
        %371 = vmatpush1.bf16.msra.mxu0 0
        %372 = vmatprep.subr.bf16.mxu0 0
        %373 = vmatpush1.bf16.msra.mxu0 0
        %374 = vmatprep.subr.bf16.mxu0 0
        %375 = vmatpush1.bf16.msra.mxu0 0
        %376 = vmatprep.subr.bf16.mxu0 0
        %377 = vmatpush1.bf16.msra.mxu0 0
        %378 = vmatprep.mubr.bf16.mxu0 0
        %379 = vmatmul.mubr.bf16.gmra.mrb[0].mxu0 %v344
        %v380 = vpop.f32.mrb[0].mxu0
        %v381 = vadd.f32 %v328, %v380
        %v382 = vpop.f32.mrb[0].mxu0
        %v383 = vpop.f32.mrb[0].mxu0
        %v384 = vpop.f32.mrb[0].mxu0
        %385 = vdwg.mxu0
        %v386 = vmax.f32 %v381, 0.0
        %v387 = vld [vmem:[#allocation2] sm:$0xff]
        %v388 = vpack.c.bf16 %v386, %v386
        %v389 = vld [vmem:[#allocation8] sm:$0xf]
        %v390 = vld [vmem:[#allocation8 + $0x4] sm:$0xf]
        %v391 = vld [vmem:[#allocation8 + $0x8] sm:$0xf]
        %v392 = vld [vmem:[#allocation8 + $0xc] sm:$0xf]
        %v393 = vld [vmem:[#allocation8 + $0x10] sm:$0xf]
        %v394 = vld [vmem:[#allocation8 + $0x14] sm:$0xf]
        %v395 = vld [vmem:[#allocation8 + $0x18] sm:$0xf]
        %v396 = vld [vmem:[#allocation8 + $0x1c] sm:$0xf]
        %v397 = vld [vmem:[#allocation8 + $0x20] sm:$0xf]
        %v398 = vld [vmem:[#allocation8 + $0x24] sm:$0xf]
        %v399 = vld [vmem:[#allocation8 + $0x28] sm:$0xf]
        %v400 = vld [vmem:[#allocation8 + $0x2c] sm:$0xf]
        %v401 = vld [vmem:[#allocation8 + $0x30] sm:$0xf]
        %v402 = vld [vmem:[#allocation8 + $0x34] sm:$0xf]
        %v403 = vld [vmem:[#allocation8 + $0x38] sm:$0xf]
        %v404 = vld [vmem:[#allocation8 + $0x3c] sm:$0xf]
        %v421 = vunpack.c.l.b16 %v389
        %v422 = vunpack.c.l.b16 %v390
        %v423 = vunpack.c.l.b16 %v391
        %v424 = vunpack.c.l.b16 %v392
        %v425 = vunpack.c.l.b16 %v393
        %v426 = vunpack.c.l.b16 %v394
        %v427 = vunpack.c.l.b16 %v395
        %v428 = vunpack.c.l.b16 %v396
        %v429 = vunpack.c.l.b16 %v397
        %v430 = vunpack.c.l.b16 %v398
        %v431 = vunpack.c.l.b16 %v399
        %v432 = vunpack.c.l.b16 %v400
        %v433 = vunpack.c.l.b16 %v401
        %v434 = vunpack.c.l.b16 %v402
        %v435 = vunpack.c.l.b16 %v403
        %v436 = vunpack.c.l.b16 %v404
        %v437 = vpack.c.b16 %v422, %v421
        %v438 = vpack.c.b16 %v424, %v423
        %v439 = vpack.c.b16 %v426, %v425
        %v440 = vpack.c.b16 %v428, %v427
        %v441 = vpack.c.b16 %v430, %v429
        %v442 = vpack.c.b16 %v432, %v431
        %v443 = vpack.c.b16 %v434, %v433
        %v444 = vpack.c.b16 %v436, %v435
        %453 = vmatprep.subr.bf16.mxu0 0
        %454 = vmatpush1.bf16.msra.mxu0 %v437
        %455 = vmatprep.subr.bf16.mxu0 0
        %456 = vmatpush1.bf16.msra.mxu0 %v438
        %457 = vmatprep.subr.bf16.mxu0 0
        %458 = vmatpush1.bf16.msra.mxu0 %v439
        %459 = vmatprep.subr.bf16.mxu0 0
        %460 = vmatpush1.bf16.msra.mxu0 %v440
        %461 = vmatprep.subr.bf16.mxu0 0
        %462 = vmatpush1.bf16.msra.mxu0 %v441
        %463 = vmatprep.subr.bf16.mxu0 0
        %464 = vmatpush1.bf16.msra.mxu0 %v442
        %465 = vmatprep.subr.bf16.mxu0 0
        %466 = vmatpush1.bf16.msra.mxu0 %v443
        %467 = vmatprep.subr.bf16.mxu0 0
        %468 = vmatpush1.bf16.msra.mxu0 %v444
        %469 = vmatprep.subr.bf16.mxu0 0
        %470 = vmatpush1.bf16.msra.mxu0 0
        %471 = vmatprep.subr.bf16.mxu0 0
        %472 = vmatpush1.bf16.msra.mxu0 0
        %473 = vmatprep.subr.bf16.mxu0 0
        %474 = vmatpush1.bf16.msra.mxu0 0
        %475 = vmatprep.subr.bf16.mxu0 0
        %476 = vmatpush1.bf16.msra.mxu0 0
        %477 = vmatprep.subr.bf16.mxu0 0
        %478 = vmatpush1.bf16.msra.mxu0 0
        %479 = vmatprep.subr.bf16.mxu0 0
        %480 = vmatpush1.bf16.msra.mxu0 0
        %481 = vmatprep.subr.bf16.mxu0 0
        %482 = vmatpush1.bf16.msra.mxu0 0
        %483 = vmatprep.subr.bf16.mxu0 0
        %484 = vmatpush1.bf16.msra.mxu0 0
        %485 = vmatprep.mubr.bf16.mxu0 0
        %486 = vmatmul.mubr.bf16.gmra.mrb[0].mxu0 %v388
        %v487 = vpop.f32.mrb[0].mxu0
        %v488 = vadd.f32 0.0, %v487
        %v489 = vpop.f32.mrb[0].mxu0
        %v490 = vpop.f32.mrb[0].mxu0
        %v491 = vpop.f32.mrb[0].mxu0
        %492 = vdwg.mxu0
        %v493 = vadd.f32 %v387, %v488
        %494 = vst [vmem:[#allocation2] sm:$0xff] %v493
        // Predicated region
        $region57: #{fully_connected_pallas.1} parent=39 // pred_check
          %p495 = pneg %p312
        $region58: #{fully_connected_pallas.1} parent=39 // pred_check_branch
          %497 = sbr.rel (%p495) target = $region60
        $region59: #{fully_connected_pallas.1} parent=39 // pred_region
          %v498 = vld [vmem:[#allocation2] sm:$0xff]
          %v499 = vld [vmem:[%s4] sm:$0x1]
          %v501 = vlaneseq
          %v502 = vshrl.u32 %v501, 7
          %v503 = vsub.s32 0, %v502
          %v504 = vrot.slane %v499, %v503
          %v506 = vadd.f32 %v498, %v504
          %507 = vst [vmem:[%s306] sm:$0xff] %v506
        $region60: #{fully_connected_pallas.1} parent=39 // pred_fallthru
          _
        %s508 = sand.u32 %s168, 1
        %s509 = scalar_lea.sflag [#allocation5], %s508
        %s510 = sand.u32 %s168, 1
        %s511 = smul.addr %s510, 8
        %s512 = scalar_lea.vmem [#allocation9], %s511
        // Predicated region
        $region61: #{fully_connected_pallas.1} parent=39 // pred_check
          %p513 = pneg %p178
        $region62: #{fully_connected_pallas.1} parent=39 // pred_check_branch
          %515 = sbr.rel (%p513) target = $region64
        $region63: #{fully_connected_pallas.1} parent=39 // pred_region
          %s517 = ssub.s32 128, 128
          %518 = vsyncadd %s509, %s517
          %s519 = smul.addr %s27, 128
          %s520 = scalar_lea.hbm %s5, %s519
          %s522 = sshll.u32 %s512, 4
          %s523 = int_to_ptr.vmem [resolvable:$true] %s522
          %525 = dma.vmem_to_hbm [thread:$0]  %s523, 128, %s520, %s509
        $region64: #{fully_connected_pallas.1} parent=39 // pred_fallthru
          _
      $region40: #{fully_connected_pallas.1} parent=5 // pred_fallthru
        _
      %p526 = scmp.le.s32.totalorder 2, %s18
      // Predicated region
      $region65: #{fully_connected_pallas.1} parent=5 // pred_check
        %p527 = pneg %p526
      $region66: #{fully_connected_pallas.1} parent=5 // pred_check_branch
        %529 = sbr.rel (%p527) target = $region68
      $region67: #{fully_connected_pallas.1} parent=5 // pred_region
        %s530 = ssub.s32 %s18, 2
        // Predicated region
        $region69: #{fully_connected_pallas.1} parent=67 // pred_check
          %p531 = pneg %p184
        $region70: #{fully_connected_pallas.1} parent=67 // pred_check_branch
          %533 = sbr.rel (%p531) target = $region72
        $region71: #{fully_connected_pallas.1} parent=67 // pred_region
          %s534 = sand.u32 %s169, 1
          %s535 = scalar_lea.sflag [#allocation5], %s534
          %s536 = sand.u32 %s169, 1
          %s537 = smul.addr %s536, 8
          %s538 = scalar_lea.vmem [#allocation9], %s537
          %539 = dma.done %s535, 128
        $region72: #{fully_connected_pallas.1} parent=67 // pred_fallthru
          _
      $region68: #{fully_connected_pallas.1} parent=5 // pred_fallthru
        _
    $region6: #{fully_connected_pallas.1} parent=1 // loop_footer
      %s22 = sadd.s32 1, %s18
    $region7: #{fully_connected_pallas.1} parent=1 // loop_footer_branch
      %17 = sbr.rel target = $region3
    $region8: #{fully_connected_pallas.1} parent=1 // loop_exit
      _
    %540 = vsyncpa [#allocation4], 1
    %s541 = scalar_lea.sflag [#allocation4], 1
    %542 = vsyncpa %s541, 1
    %543 = vsyncpa [#allocation7], 1
    %544 = vsyncpa [#allocation5], 1
    %s545 = scalar_lea.sflag [#allocation5], 1
    %546 = vsyncpa %s545, 1

</llo_original>
